<compile_context>
chip_gen: v5e
topology: v5e:2x2
jax: 0.10.0
libtpu: 0.0.40
codegen_flags: <defaults>
</compile_context>

<pallas_src>
import functools

import jax
import jax.numpy as jnp
from jax.experimental import pallas as pl
from jax.experimental.pallas import tpu as pltpu


# ---------------------------------------------------------------------------
# Single-pass kernel: an entire (block_t, B, C) slab is resident in VMEM.
# ---------------------------------------------------------------------------
def _bntt_fused_kernel(x_ref, gamma_ref, beta_ref, out_ref, *, eps):
    x = x_ref[...].astype(jnp.float32)            # f32 stats (v5e has no bf16 VPU)
    mean = jnp.mean(x, axis=1, keepdims=True)     # (bt, 1, C) sublane reduction
    centered = x - mean
    var = jnp.mean(centered * centered, axis=1, keepdims=True)   # biased variance
    inv_std = jax.lax.rsqrt(var + eps)            # EUP
    scale = gamma_ref[...] * inv_std              # (bt, 1, C)
    shift = beta_ref[...] - mean * scale
    # Single fused affine on the original x: `centered` dies at the reduction,
    # one fewer full-tile VPU pass and one less full-tile live value.
    out_ref[...] = (x * scale + shift).astype(out_ref.dtype)


# ---------------------------------------------------------------------------
# Two-pass path (batch axis tiled), pass 1: per-(t, c) sum and sum-of-squares.
# ---------------------------------------------------------------------------
def _bntt_stats_kernel(x_ref, sum_ref, sumsq_ref, *, batch, block_b):
    j = pl.program_id(1)

    @pl.when(j == 0)
    def _():
        sum_ref[...] = jnp.zeros_like(sum_ref)
        sumsq_ref[...] = jnp.zeros_like(sumsq_ref)

    x = x_ref[...].astype(jnp.float32)            # (bt, block_b, C)
    if batch % block_b != 0:
        # Mask padded batch rows of the tail block out of the statistics.
        row = jax.lax.broadcasted_iota(jnp.int32, x.shape, 1) + j * block_b
        x = jnp.where(row < batch, x, 0.0)
    sum_ref[...] += jnp.sum(x, axis=1, keepdims=True)
    sumsq_ref[...] += jnp.sum(x * x, axis=1, keepdims=True)


# Two-pass path, pass 2: apply the per-timestep affine (fully parallel).
def _bntt_apply_kernel(x_ref, scale_ref, shift_ref, out_ref):
    x = x_ref[...].astype(jnp.float32)
    out_ref[...] = (x * scale_ref[...] + shift_ref[...]).astype(out_ref.dtype)


# ---------------------------------------------------------------------------
# Wrappers
# ---------------------------------------------------------------------------
def bntt_forward(x, gamma, beta, *, eps=1e-5, tile_bytes=1 << 20):
    """BNTT forward for x of shape (T, B, C) with per-timestep gamma/beta (T, C)."""
    T, B, C = x.shape
    assert gamma.shape == (T, C) and beta.shape == (T, C)
    orig_c = C
    itemsize = jnp.dtype(x.dtype).itemsize

    # Lane density: pad C to a multiple of 128 when that at most doubles the
    # traffic; padded channels produce zeros and are sliced off afterwards.
    c_pad = 128 * pl.cdiv(C, 128)
    if c_pad != C and c_pad <= 2 * C:
        x = jnp.pad(x, ((0, 0), (0, 0), (0, c_pad - C)))
        gamma = jnp.pad(gamma, ((0, 0), (0, c_pad - C)))
        beta = jnp.pad(beta, ((0, 0), (0, c_pad - C)))
        C = c_pad

    gamma3 = gamma.reshape(T, 1, C).astype(jnp.float32)
    beta3 = beta.reshape(T, 1, C).astype(jnp.float32)

    block_t = tile_bytes // (B * C * itemsize)

    if block_t >= 1:
        # ---- single pass: whole batch of block_t timesteps in one tile -----
        block_t = min(block_t, T)
        if T >= 2:
            # Keep >= 2 grid steps so the parallel time axis can shard across
            # both v7x TensorCores.
            block_t = min(block_t, (T + 1) // 2)
        grid = (pl.cdiv(T, block_t),)
        out = pl.pallas_call(
            functools.partial(_bntt_fused_kernel, eps=eps),
            out_shape=jax.ShapeDtypeStruct((T, B, C), x.dtype),
            grid_spec=pltpu.PrefetchScalarGridSpec(
                num_scalar_prefetch=0,
                grid=grid,
                in_specs=[
                    pl.BlockSpec((block_t, B, C), lambda i: (i, 0, 0)),
                    pl.BlockSpec((block_t, 1, C), lambda i: (i, 0, 0)),
                    pl.BlockSpec((block_t, 1, C), lambda i: (i, 0, 0)),
                ],
                out_specs=pl.BlockSpec((block_t, B, C), lambda i: (i, 0, 0)),
            ),
            compiler_params=pltpu.CompilerParams(
                dimension_semantics=("parallel",)),
        )(x, gamma3, beta3)
    else:
        # ---- two passes: one timestep slab exceeds the tile budget ---------
        block_b = max(8, (tile_bytes // (C * itemsize)) // 8 * 8)
        if block_b >= B:
            block_b = B          # full-dim block is always layout-legal
        nb = pl.cdiv(B, block_b)
        grid = (T, nb)

        # Pass 1: per-(t, c) sum and sum-of-squares, reducing over batch tiles.
        s, ss = pl.pallas_call(
            functools.partial(_bntt_stats_kernel, batch=B, block_b=block_b),
            out_shape=(
                jax.ShapeDtypeStruct((T, 1, C), jnp.float32),
                jax.ShapeDtypeStruct((T, 1, C), jnp.float32),
            ),
            grid_spec=pltpu.PrefetchScalarGridSpec(
                num_scalar_prefetch=0,
                grid=grid,
                in_specs=[pl.BlockSpec((1, block_b, C), lambda i, j: (i, j, 0))],
                out_specs=(
                    pl.BlockSpec((1, 1, C), lambda i, j: (i, 0, 0)),
                    pl.BlockSpec((1, 1, C), lambda i, j: (i, 0, 0)),
                ),
            ),
            compiler_params=pltpu.CompilerParams(
                dimension_semantics=("parallel", "arbitrary")),
        )(x)

        # Tiny (T, 1, C) math between the two kernel calls.
        mean = s / B
        var = jnp.maximum(ss / B - mean * mean, 0.0)   # biased variance
        inv_std = jax.lax.rsqrt(var + eps)
        scale = gamma3 * inv_std
        shift = beta3 - mean * scale

        # Pass 2: fully parallel affine application.
        out = pl.pallas_call(
            _bntt_apply_kernel,
            out_shape=jax.ShapeDtypeStruct((T, B, C), x.dtype),
            grid_spec=pltpu.PrefetchScalarGridSpec(
                num_scalar_prefetch=0,
                grid=grid,
                in_specs=[
                    pl.BlockSpec((1, block_b, C), lambda i, j: (i, j, 0)),
                    pl.BlockSpec((1, 1, C), lambda i, j: (i, 0, 0)),
                    pl.BlockSpec((1, 1, C), lambda i, j: (i, 0, 0)),
                ],
                out_specs=pl.BlockSpec((1, block_b, C), lambda i, j: (i, j, 0)),
            ),
            compiler_params=pltpu.CompilerParams(
                dimension_semantics=("parallel", "parallel")),
        )(x, scale, shift)

    if C != orig_c:
        out = out[..., :orig_c]
    return out


def bntt_layer_forward(x, gamma, beta, *, eps=1e-5, tile_bytes=1 << 20):
    """Forward of BNTT_Layer.  x: (T, B, C) or conv-style (T, B, C, H, W)."""
    if x.ndim == 3:
        return bntt_forward(x, gamma, beta, eps=eps, tile_bytes=tile_bytes)
    if x.ndim == 5:
        T, B, C, H, W = x.shape
        x_flat = jnp.transpose(x, (0, 1, 3, 4, 2)).reshape(T, B * H * W, C)
        y = bntt_forward(x_flat, gamma, beta, eps=eps, tile_bytes=tile_bytes)
        return jnp.transpose(y.reshape(T, B, H, W, C), (0, 1, 4, 2, 3))
    raise ValueError(f"unsupported input rank {x.ndim}")


def bntt_forward_ref(x, gamma, beta, eps=1e-5):
    """Pure-JAX reference matching the PyTorch forward (training-mode BN)."""
    xf = x.astype(jnp.float32)
    if x.ndim == 3:
        red, pshape = (1,), (x.shape[0], 1, -1)
    else:
        red, pshape = (1, 3, 4), (x.shape[0], 1, -1, 1, 1)
    g = gamma.reshape(pshape).astype(jnp.float32)
    b = beta.reshape(pshape).astype(jnp.float32)
    mean = xf.mean(axis=red, keepdims=True)
    var = ((xf - mean) ** 2).mean(axis=red, keepdims=True)
    y = g * (xf - mean) / jnp.sqrt(var + eps) + b
    return y.astype(x.dtype)


if __name__ == "__main__":
    key = jax.random.PRNGKey(0)
    k1, k2, k3, k4, k5, k6 = jax.random.split(key, 6)

    # Dense case: (step, batch, input_features); prime step exercises the
    # cdiv tail block and the >= 2-grid-step cap.
    T, B, C = 7, 16, 128
    x = jax.random.normal(k1, (T, B, C), dtype=jnp.float32)
    gamma = 0.5 + 0.1 * jax.random.normal(k2, (T, C), dtype=jnp.float32)
    beta = 0.1 * jax.random.normal(k3, (T, C), dtype=jnp.float32)

    ref = bntt_forward_ref(x, gamma, beta)
    out = jax.block_until_ready(bntt_layer_forward(x, gamma, beta))
    assert out.shape == x.shape and out.dtype == x.dtype
    assert jnp.allclose(out, ref, atol=1e-3, rtol=1e-3), "single-pass mismatch"

    # Force the batch-tiled two-pass path on the same data.
    out2 = jax.block_until_ready(
        bntt_layer_forward(x, gamma, beta, tile_bytes=4096))
    assert jnp.allclose(out2, ref, atol=1e-3, rtol=1e-3), "two-pass mismatch"

    # Conv-style case: (step, batch, channels, H, W); spatial dims folded into
    # the batch axis (BatchNorm2d reduction set).
    Tc, Bc, Cc, Hc, Wc = 4, 2, 4, 16, 16
    xc = jax.random.normal(k4, (Tc, Bc, Cc, Hc, Wc), dtype=jnp.float32)
    gc = 0.5 + 0.1 * jax.random.normal(k5, (Tc, Cc), dtype=jnp.float32)
    bc = 0.1 * jax.random.normal(k6, (Tc, Cc), dtype=jnp.float32)

    refc = bntt_forward_ref(xc, gc, bc)
    outc = jax.block_until_ready(bntt_layer_forward(xc, gc, bc))
    assert outc.shape == xc.shape and outc.dtype == xc.dtype
    assert jnp.allclose(outc, refc, atol=1e-3, rtol=1e-3), "conv-case mismatch"

    print("KERNEL_OK")
</pallas_src>

<mosaic_0001>
module attributes {stable_mosaic.version = 11 : i64} {
  func.func @_bntt_fused_kernel(%arg0: i32, %arg1: memref<4x16x128xf32, #tpu.memory_space<vmem>>, %arg2: memref<4x1x128xf32, #tpu.memory_space<vmem>>, %arg3: memref<4x1x128xf32, #tpu.memory_space<vmem>>, %arg4: memref<4x16x128xf32, #tpu.memory_space<vmem>>) attributes {dimension_semantics = [#tpu.dimension_semantics<parallel>], iteration_bounds = array<i64: 2>, scalar_prefetch = 0 : i64, scratch_operands = 0 : i64, tpu.core_type = #tpu.core_type<tc>, window_params = [{transform_indices = @transform_0, window_bounds = array<i64: 4, 16, 128>}, {transform_indices = @transform_1, window_bounds = array<i64: 4, 1, 128>}, {transform_indices = @transform_2, window_bounds = array<i64: 4, 1, 128>}, {transform_indices = @transform_3, window_bounds = array<i64: 4, 16, 128>}]} {
    %c0 = arith.constant 0 : index
    %c0_0 = arith.constant 0 : index
    %c0_1 = arith.constant 0 : index
    %0 = vector.load %arg1[%c0, %c0_0, %c0_1] : memref<4x16x128xf32, #tpu.memory_space<vmem>>, vector<4x16x128xf32>
    %cst = arith.constant dense<0.000000e+00> : vector<4x128xf32>
    %1 = vector.multi_reduction <add>, %0, %cst [1] : vector<4x16x128xf32> to vector<4x128xf32>
    %2 = vector.shape_cast %1 : vector<4x128xf32> to vector<4x1x128xf32>
    %cst_2 = arith.constant 1.600000e+01 : f32
    %3 = vector.broadcast %cst_2 : f32 to vector<4x1x128xf32>
    %4 = arith.divf %2, %3 : vector<4x1x128xf32>
    %5 = vector.broadcast %4 : vector<4x1x128xf32> to vector<4x16x128xf32>
    %6 = arith.subf %0, %5 : vector<4x16x128xf32>
    %7 = arith.mulf %6, %6 : vector<4x16x128xf32>
    %cst_3 = arith.constant dense<0.000000e+00> : vector<4x128xf32>
    %8 = vector.multi_reduction <add>, %7, %cst_3 [1] : vector<4x16x128xf32> to vector<4x128xf32>
    %9 = vector.shape_cast %8 : vector<4x128xf32> to vector<4x1x128xf32>
    %cst_4 = arith.constant 1.600000e+01 : f32
    %10 = vector.broadcast %cst_4 : f32 to vector<4x1x128xf32>
    %11 = arith.divf %9, %10 : vector<4x1x128xf32>
    %cst_5 = arith.constant 9.99999974E-6 : f32
    %12 = vector.broadcast %cst_5 : f32 to vector<4x1x128xf32>
    %13 = arith.addf %11, %12 : vector<4x1x128xf32>
    %14 = math.rsqrt %13 : vector<4x1x128xf32>
    %c0_6 = arith.constant 0 : index
    %c0_7 = arith.constant 0 : index
    %c0_8 = arith.constant 0 : index
    %15 = vector.load %arg2[%c0_6, %c0_7, %c0_8] : memref<4x1x128xf32, #tpu.memory_space<vmem>>, vector<4x1x128xf32>
    %16 = arith.mulf %15, %14 : vector<4x1x128xf32>
    %c0_9 = arith.constant 0 : index
    %c0_10 = arith.constant 0 : index
    %c0_11 = arith.constant 0 : index
    %17 = vector.load %arg3[%c0_9, %c0_10, %c0_11] : memref<4x1x128xf32, #tpu.memory_space<vmem>>, vector<4x1x128xf32>
    %18 = arith.mulf %4, %16 : vector<4x1x128xf32>
    %19 = arith.subf %17, %18 : vector<4x1x128xf32>
    %20 = vector.broadcast %16 : vector<4x1x128xf32> to vector<4x16x128xf32>
    %21 = arith.mulf %0, %20 : vector<4x16x128xf32>
    %22 = vector.broadcast %19 : vector<4x1x128xf32> to vector<4x16x128xf32>
    %23 = arith.addf %21, %22 : vector<4x16x128xf32>
    %c0_12 = arith.constant 0 : index
    %c0_13 = arith.constant 0 : index
    %c0_14 = arith.constant 0 : index
    %24 = vector.load %arg4[%c0_12, %c0_13, %c0_14] : memref<4x16x128xf32, #tpu.memory_space<vmem>>, vector<4x16x128xf32>
    tpu.vector_store %arg4[%c0_12, %c0_13, %c0_14], %23 {strides = array<i32>} : memref<4x16x128xf32, #tpu.memory_space<vmem>>, vector<4x16x128xf32>,
    return
  }
  func.func @transform_0(%arg0: i32) -> (i32, i32, i32) {
    %c0_i32 = arith.constant 0 : i32
    %c0_i32_0 = arith.constant 0 : i32
    %c0_i32_1 = arith.constant 0 : i32
    return %arg0, %c0_i32, %c0_i32_0 : i32, i32, i32
  }
  func.func @transform_1(%arg0: i32) -> (i32, i32, i32) {
    %c0_i32 = arith.constant 0 : i32
    %c0_i32_0 = arith.constant 0 : i32
    %c0_i32_1 = arith.constant 0 : i32
    return %arg0, %c0_i32, %c0_i32_0 : i32, i32, i32
  }
  func.func @transform_2(%arg0: i32) -> (i32, i32, i32) {
    %c0_i32 = arith.constant 0 : i32
    %c0_i32_0 = arith.constant 0 : i32
    %c0_i32_1 = arith.constant 0 : i32
    return %arg0, %c0_i32, %c0_i32_0 : i32, i32, i32
  }
  func.func @transform_3(%arg0: i32) -> (i32, i32, i32) {
    %c0_i32 = arith.constant 0 : i32
    %c0_i32_0 = arith.constant 0 : i32
    %c0_i32_1 = arith.constant 0 : i32
    return %arg0, %c0_i32, %c0_i32_0 : i32, i32, i32
  }
}

</mosaic_0001>

<llo_original>
// kernel: tpu_custom_call.1
$region0: #{tpu_custom_call.1}
  #allocation0 [shape = 'u32[]', space=smem, size = 0x4, offset = 0x4, fixed_abs, tag = 'smem constant byte address 0x4 - core index']
  #allocation1 [shape = 'u32[72,128]{1,0:T(1,128)}', space=vmem, size = 0x9000, scoped, tag = 'internal scratch']
  %s0 = inlined_call_operand.hbm [shape: f32[7,16,128], index: 0, kind: input, shape index: {}]
  %s1 = inlined_call_operand.hbm [shape: f32[7,1,128], index: 1, kind: input, shape index: {}]
  %s2 = inlined_call_operand.hbm [shape: f32[7,1,128], index: 2, kind: input, shape index: {}]
  %s3 = inlined_call_operand.hbm [shape: f32[7,16,128], index: 3, kind: output, shape index: {}]
  %s4 = sld [smem:[#allocation0]]
  $region57: #{tpu_custom_call.1} parent=0
    _
  %s6 = ssub.s32 1, %s4
  %s7 = scalar_select 0, %s6, %s4
  $region1: #{tpu_custom_call.1} parent=0
    #allocation2 [shape = 'u8[65536]{0}', space=vmem, size = 0x10000, scoped, tag = 'input window, operand 0']
    #allocation3 [shape = 's32[2]{0}', space=sflag, size = 0x8, scoped, tag = 'scoped memory for tpu_custom_call.1']
    #allocation4 [shape = 's32[2]{0}', space=sflag, size = 0x8, scoped, tag = 'scoped memory for tpu_custom_call.1']
    #allocation5 [shape = 'u8[4096]{0}', space=vmem, size = 0x1000, scoped, tag = 'input window, operand 1']
    #allocation6 [shape = 's32[2]{0}', space=sflag, size = 0x8, scoped, tag = 'scoped memory for tpu_custom_call.1']
    #allocation7 [shape = 'u8[4096]{0}', space=vmem, size = 0x1000, scoped, tag = 'input window, operand 2']
    #allocation8 [shape = 'u8[65536]{0}', space=vmem, size = 0x10000, scoped, tag = 'output window, operand 0']
    %8 = vsyncpa [#allocation3], 0
    %s9 = scalar_lea.sflag [#allocation3], 1
    %10 = vsyncpa %s9, 0
    %11 = vsyncpa [#allocation6], 0
    %s12 = scalar_lea.sflag [#allocation6], 1
    %13 = vsyncpa %s12, 0
    %14 = vsyncpa [#allocation4], 0
    %s15 = scalar_lea.sflag [#allocation4], 1
    %16 = vsyncpa %s15, 0
    loop: start=0, step=1, limit=4
    $region2: #{tpu_custom_call.1} parent=1 // loop_pre_header
      _
    $region3: #{tpu_custom_call.1} parent=1 // loop_header
      %s18 = sphi 0, %s22
      %p19 = scmp.ge.s32.totalorder %s18, 4
      %s28 = sphi 0, %s30
      %s31 = sphi 0, %s28
      %s32 = sphi 0, %s31
      %s48 = sphi 0, %s32
      %s54 = sphi 0, %s56
      %s57 = sphi 0, %s54
      %s58 = sphi 0, %s57
      %s74 = sphi 0, %s58
      %s80 = sphi 0, %s82
      %s83 = sphi 0, %s80
      %s84 = sphi 0, %s83
      %s100 = sphi 0, %s84
      %s106 = sphi 0, %s108
      %s109 = sphi 0, %s106
      %s110 = sphi 0, %s109
      %s126 = sphi 0, %s110
    $region4: #{tpu_custom_call.1} parent=1 // loop_header_branch
      %21 = sbr.rel (%p19) target = $region8
    $region5: #{tpu_custom_call.1} parent=1 // loop_body
      %s23 = ssub.s32 %s18, 1
      %s24 = ssub.s32 %s18, 2
      %s25 = sadd.s32 %s18, 1
      %s26 = ssub.s32 %s18, %s25
      %p27 = scmp.eq.s32.totalorder %s26, 0
      %s29 = sadd.s32 %s28, 1
      %s30 = scalar_select %p27, %s28, %s29
      %p33 = pneg %p27
      %p34 = scmp.eq.s32.totalorder %s18, 1
      %p35 = por %p33, %p34
      %p36 = scmp.ne.s32.totalorder %s28, %s31
      %p37 = scmp.eq.s32.totalorder %s18, 0
      %p38 = por %p36, %p37
      %p39 = scmp.ne.s32.totalorder %s28, %s31
      %p40 = scmp.eq.s32.totalorder %s23, 1
      %p41 = por %p39, %p40
      %p42 = scmp.ne.s32.totalorder %s31, %s32
      %p43 = scmp.eq.s32.totalorder %s23, 0
      %p44 = por %p42, %p43
      %p45 = scmp.ne.s32.totalorder %s31, %s32
      %p46 = scmp.eq.s32.totalorder %s24, 1
      %p47 = por %p45, %p46
      %p49 = scmp.ne.s32.totalorder %s32, %s48
      %p50 = scmp.eq.s32.totalorder %s24, 0
      %p51 = por %p49, %p50
      %s52 = ssub.s32 %s18, %s25
      %p53 = scmp.eq.s32.totalorder %s52, 0
      %s55 = sadd.s32 %s54, 1
      %s56 = scalar_select %p53, %s54, %s55
      %p59 = pneg %p53
      %p60 = scmp.eq.s32.totalorder %s18, 1
      %p61 = por %p59, %p60
      %p62 = scmp.ne.s32.totalorder %s54, %s57
      %p63 = scmp.eq.s32.totalorder %s18, 0
      %p64 = por %p62, %p63
      %p65 = scmp.ne.s32.totalorder %s54, %s57
      %p66 = scmp.eq.s32.totalorder %s23, 1
      %p67 = por %p65, %p66
      %p68 = scmp.ne.s32.totalorder %s57, %s58
      %p69 = scmp.eq.s32.totalorder %s23, 0
      %p70 = por %p68, %p69
      %p71 = scmp.ne.s32.totalorder %s57, %s58
      %p72 = scmp.eq.s32.totalorder %s24, 1
      %p73 = por %p71, %p72
      %p75 = scmp.ne.s32.totalorder %s58, %s74
      %p76 = scmp.eq.s32.totalorder %s24, 0
      %p77 = por %p75, %p76
      %s78 = ssub.s32 %s18, %s25
      %p79 = scmp.eq.s32.totalorder %s78, 0
      %s81 = sadd.s32 %s80, 1
      %s82 = scalar_select %p79, %s80, %s81
      %p85 = pneg %p79
      %p86 = scmp.eq.s32.totalorder %s18, 1
      %p87 = por %p85, %p86
      %p88 = scmp.ne.s32.totalorder %s80, %s83
      %p89 = scmp.eq.s32.totalorder %s18, 0
      %p90 = por %p88, %p89
      %p91 = scmp.ne.s32.totalorder %s80, %s83
      %p92 = scmp.eq.s32.totalorder %s23, 1
      %p93 = por %p91, %p92
      %p94 = scmp.ne.s32.totalorder %s83, %s84
      %p95 = scmp.eq.s32.totalorder %s23, 0
      %p96 = por %p94, %p95
      %p97 = scmp.ne.s32.totalorder %s83, %s84
      %p98 = scmp.eq.s32.totalorder %s24, 1
      %p99 = por %p97, %p98
      %p101 = scmp.ne.s32.totalorder %s84, %s100
      %p102 = scmp.eq.s32.totalorder %s24, 0
      %p103 = por %p101, %p102
      %s104 = ssub.s32 %s18, %s25
      %p105 = scmp.eq.s32.totalorder %s104, 0
      %s107 = sadd.s32 %s106, 1
      %s108 = scalar_select %p105, %s106, %s107
      %p111 = pneg %p105
      %p112 = scmp.eq.s32.totalorder %s18, 1
      %p113 = por %p111, %p112
      %p114 = scmp.ne.s32.totalorder %s106, %s109
      %p115 = scmp.eq.s32.totalorder %s18, 0
      %p116 = por %p114, %p115
      %p117 = scmp.ne.s32.totalorder %s106, %s109
      %p118 = scmp.eq.s32.totalorder %s23, 1
      %p119 = por %p117, %p118
      %p120 = scmp.ne.s32.totalorder %s109, %s110
      %p121 = scmp.eq.s32.totalorder %s23, 0
      %p122 = por %p120, %p121
      %p123 = scmp.ne.s32.totalorder %s109, %s110
      %p124 = scmp.eq.s32.totalorder %s24, 1
      %p125 = por %p123, %p124
      %p127 = scmp.ne.s32.totalorder %s110, %s126
      %p128 = scmp.eq.s32.totalorder %s24, 0
      %p129 = por %p127, %p128
      %p130 = scmp.le.s32.totalorder 1, %s18
      %p131 = scmp.lt.s32.totalorder %s18, 3
      %p132 = pnand %p130, %p131
      %p133 = pneg %p132
      // Predicated region
      $region9: #{tpu_custom_call.1} parent=5 // pred_check
        _
      $region10: #{tpu_custom_call.1} parent=5 // pred_check_branch
        %135 = sbr.rel (%p132) target = $region12
      $region11: #{tpu_custom_call.1} parent=5 // pred_region
        %s136 = ssub.s32 %s18, 1
      $region12: #{tpu_custom_call.1} parent=5 // pred_fallthru
        _
      %p137 = scmp.lt.s32.totalorder %s18, 2
      // Predicated region
      $region13: #{tpu_custom_call.1} parent=5 // pred_check
        %p138 = pneg %p137
      $region14: #{tpu_custom_call.1} parent=5 // pred_check_branch
        %140 = sbr.rel (%p138) target = $region16
      $region15: #{tpu_custom_call.1} parent=5 // pred_region
        // Predicated region
        $region17: #{tpu_custom_call.1} parent=15 // pred_check
          %p141 = pneg %p38
        $region18: #{tpu_custom_call.1} parent=15 // pred_check_branch
          %143 = sbr.rel (%p141) target = $region20
        $region19: #{tpu_custom_call.1} parent=15 // pred_region
          %s144 = sand.u32 %s28, 1
          %s145 = scalar_lea.sflag [#allocation3], %s144
          %s146 = sand.u32 %s28, 1
          %s147 = smul.addr %s146, 64
          %s148 = scalar_lea.vmem [#allocation2], %s147
          %s149 = smul.u32 4, %s18
          %s150 = ssub.s32 7, %s149
          %p151 = scmp.lt.s32.totalorder %s150, 4
          %s152 = scalar_select %p151, %s150, 4
          %s153 = smul.u32 8, %s152
          %s154 = smul.u32 %s153, 2
          %s155 = ssub.s32 64, %s154
          %s156 = sshll.u32 %s155, 4
          %157 = vsyncadd %s145, %s156
          %p158 = scmp.ne.s32.totalorder 0, %s154
          %s159 = smul.addr %s149, 2
          %s160 = smul.addr %s159, 8
          %s161 = scalar_lea.hbm %s0, %s160
          %s162 = smul.u32 %s152, 2
          %s163 = smul.u32 8, %s162
          %s164 = sshll.u32 %s161, 4
          %s165 = int_to_ptr.hbm [resolvable:$true] %s164
          %s166 = sshll.u32 %s148, 4
          %s167 = int_to_ptr.vmem [resolvable:$true] %s166
          %s168 = sshll.u32 %s163, 4
          %172 = dma.hbm_to_vmem [thread:$0]  (%p158), %s165, %s168, %s167, %s145, 128, 128, 8
        $region20: #{tpu_custom_call.1} parent=15 // pred_fallthru
          _
        // Predicated region
        $region21: #{tpu_custom_call.1} parent=15 // pred_check
          %p173 = pneg %p64
        $region22: #{tpu_custom_call.1} parent=15 // pred_check_branch
          %175 = sbr.rel (%p173) target = $region24
        $region23: #{tpu_custom_call.1} parent=15 // pred_region
          %s176 = sand.u32 %s18, 1
          %s177 = scalar_lea.sflag [#allocation6], %s176
          %s178 = sand.u32 %s54, 1
          %s179 = smul.addr %s178, 4
          %s180 = scalar_lea.vmem [#allocation5], %s179
          %s181 = smul.u32 4, %s18
          %s182 = ssub.s32 7, %s181
          %p183 = scmp.lt.s32.totalorder %s182, 4
          %s184 = scalar_select %p183, %s182, 4
          %s185 = ssub.s32 4, %s184
          %s186 = sshll.u32 %s185, 4
          %187 = vsyncadd %s177, %s186
          %p188 = scmp.ne.s32.totalorder 0, %s184
          %s189 = scalar_lea.hbm %s1, %s181
          %s190 = sshll.u32 %s189, 4
          %s191 = int_to_ptr.hbm [resolvable:$true] %s190
          %s192 = sshll.u32 %s180, 4
          %s193 = int_to_ptr.vmem [resolvable:$true] %s192
          %s194 = sshll.u32 %s184, 4
          %198 = dma.hbm_to_vmem [thread:$0]  (%p188), %s191, %s194, %s193, %s177, 16, 16, 1
        $region24: #{tpu_custom_call.1} parent=15 // pred_fallthru
          _
        // Predicated region
        $region25: #{tpu_custom_call.1} parent=15 // pred_check
          %p199 = pneg %p90
        $region26: #{tpu_custom_call.1} parent=15 // pred_check_branch
          %201 = sbr.rel (%p199) target = $region28
        $region27: #{tpu_custom_call.1} parent=15 // pred_region
          %s202 = sand.u32 %s18, 1
          %s203 = scalar_lea.sflag [#allocation6], %s202
          %s204 = sand.u32 %s80, 1
          %s205 = smul.addr %s204, 4
          %s206 = scalar_lea.vmem [#allocation7], %s205
          %s207 = smul.u32 4, %s18
          %s208 = ssub.s32 7, %s207
          %p209 = scmp.lt.s32.totalorder %s208, 4
          %s210 = scalar_select %p209, %s208, 4
          %s211 = ssub.s32 4, %s210
          %s212 = sshll.u32 %s211, 4
          %213 = vsyncadd %s203, %s212
          %p214 = scmp.ne.s32.totalorder 0, %s210
          %s215 = scalar_lea.hbm %s2, %s207
          %s216 = sshll.u32 %s215, 4
          %s217 = int_to_ptr.hbm [resolvable:$true] %s216
          %s218 = sshll.u32 %s206, 4
          %s219 = int_to_ptr.vmem [resolvable:$true] %s218
          %s220 = sshll.u32 %s210, 4
          %224 = dma.hbm_to_vmem [thread:$0]  (%p214), %s217, %s220, %s219, %s203, 16, 16, 1
        $region28: #{tpu_custom_call.1} parent=15 // pred_fallthru
          _
      $region16: #{tpu_custom_call.1} parent=5 // pred_fallthru
        _
      %p225 = scmp.le.s32.totalorder 1, %s18
      %p226 = scmp.lt.s32.totalorder %s18, 3
      %p227 = pnand %p225, %p226
      %p228 = pneg %p227
      // Predicated region
      $region29: #{tpu_custom_call.1} parent=5 // pred_check
        _
      $region30: #{tpu_custom_call.1} parent=5 // pred_check_branch
        %230 = sbr.rel (%p227) target = $region32
      $region31: #{tpu_custom_call.1} parent=5 // pred_region
        %s231 = ssub.s32 %s18, 1
        %s232 = sand.u32 %s31, 1
        %s233 = scalar_lea.sflag [#allocation3], %s232
        %s234 = sand.u32 %s31, 1
        %s235 = smul.addr %s234, 64
        %s236 = scalar_lea.vmem [#allocation2], %s235
        // Predicated region
        $region33: #{tpu_custom_call.1} parent=31 // pred_check
          %p237 = pneg %p44
        $region34: #{tpu_custom_call.1} parent=31 // pred_check_branch
          %239 = sbr.rel (%p237) target = $region36
        $region35: #{tpu_custom_call.1} parent=31 // pred_region
          %241 = dma.done %s233, 1024
        $region36: #{tpu_custom_call.1} parent=31 // pred_fallthru
          _
        %s242 = sand.u32 %s23, 1
        %s243 = scalar_lea.sflag [#allocation6], %s242
        %s244 = sand.u32 %s57, 1
        %s245 = smul.addr %s244, 4
        %s246 = scalar_lea.vmem [#allocation5], %s245
        // Predicated region
        $region37: #{tpu_custom_call.1} parent=31 // pred_check
          %p247 = pneg %p70
        $region38: #{tpu_custom_call.1} parent=31 // pred_check_branch
          %249 = sbr.rel (%p247) target = $region40
        $region39: #{tpu_custom_call.1} parent=31 // pred_region
          %251 = dma.done %s243, 64
        $region40: #{tpu_custom_call.1} parent=31 // pred_fallthru
          _
        %s252 = sand.u32 %s23, 1
        %s253 = scalar_lea.sflag [#allocation6], %s252
        %s254 = sand.u32 %s83, 1
        %s255 = smul.addr %s254, 4
        %s256 = scalar_lea.vmem [#allocation7], %s255
        // Predicated region
        $region41: #{tpu_custom_call.1} parent=31 // pred_check
          %p257 = pneg %p96
        $region42: #{tpu_custom_call.1} parent=31 // pred_check_branch
          %259 = sbr.rel (%p257) target = $region44
        $region43: #{tpu_custom_call.1} parent=31 // pred_region
          %261 = dma.done %s253, 64
        $region44: #{tpu_custom_call.1} parent=31 // pred_fallthru
          _
        %s262 = sand.u32 %s31, 1
        %s263 = scalar_lea.sflag [#allocation3], %s262
        %s264 = sand.u32 %s31, 1
        %s265 = smul.addr %s264, 64
        %s266 = scalar_lea.vmem [#allocation2], %s265
        %p267 = pneg %p44
        %p268 = pneg %p41
        %s269 = sand.u32 %s23, 1
        %s270 = scalar_lea.sflag [#allocation6], %s269
        %s271 = sand.u32 %s57, 1
        %s272 = smul.addr %s271, 4
        %s273 = scalar_lea.vmem [#allocation5], %s272
        %p274 = pneg %p70
        %p275 = pneg %p67
        %s276 = sand.u32 %s23, 1
        %s277 = scalar_lea.sflag [#allocation6], %s276
        %s278 = sand.u32 %s83, 1
        %s279 = smul.addr %s278, 4
        %s280 = scalar_lea.vmem [#allocation7], %s279
        %p281 = pneg %p96
        %p282 = pneg %p93
        %p283 = pneg %p122
        %p284 = pneg %p119
        %s285 = sand.u32 %s109, 1
        %s286 = scalar_lea.sflag [#allocation4], %s285
        %s287 = sand.u32 %s109, 1
        %s288 = smul.addr %s287, 64
        %s289 = scalar_lea.vmem [#allocation8], %s288
        %s290 = smul.u32 4, %s23
        %s291 = ssub.s32 7, %s290
        %p292 = scmp.lt.s32.totalorder %s291, 4
        %s293 = scalar_select %p292, %s291, 4
        %s294 = smul.u32 8, %s293
        %s295 = smul.u32 %s294, 2
        %s296 = smul.u32 4, %s23
        %s297 = ssub.s32 7, %s296
        %p298 = scmp.lt.s32.totalorder %s297, 4
        %s299 = scalar_select %p298, %s297, 4
        %s300 = smul.u32 4, %s23
        %s301 = ssub.s32 7, %s300
        %p302 = scmp.lt.s32.totalorder %s301, 4
        %s303 = scalar_select %p302, %s301, 4
        %s304 = smul.u32 4, %s23
        %s305 = ssub.s32 7, %s304
        %p306 = scmp.lt.s32.totalorder %s305, 4
        %s307 = scalar_select %p306, %s305, 4
        %s308 = smul.u32 8, %s307
        %s309 = smul.u32 %s308, 2
        %v310 = vld [vmem:[%s236] sm:$0xff]
        %v311 = vld [vmem:[%s236 + $0x8] sm:$0xff]
        %v312 = vld [vmem:[%s236 + $0x10] sm:$0xff]
        %v313 = vld [vmem:[%s236 + $0x18] sm:$0xff]
        %v314 = vld [vmem:[%s236 + $0x20] sm:$0xff]
        %v315 = vld [vmem:[%s236 + $0x28] sm:$0xff]
        %v316 = vld [vmem:[%s236 + $0x30] sm:$0xff]
        %v317 = vld [vmem:[%s236 + $0x38] sm:$0xff]
        %v318 = vadd.f32 %v310, %v311
        %v319 = vrot.slane %v318, 4
        %v320 = vadd.f32 %v318, %v319
        %v321 = vrot.slane %v320, 2
        %v322 = vadd.f32 %v320, %v321
        %v323 = vrot.slane %v322, 1
        %v324 = vadd.f32 %v322, %v323
        %v325 = vadd.f32 %v312, %v313
        %v326 = vrot.slane %v325, 4
        %v327 = vadd.f32 %v325, %v326
        %v328 = vrot.slane %v327, 2
        %v329 = vadd.f32 %v327, %v328
        %v330 = vrot.slane %v329, 1
        %v331 = vadd.f32 %v329, %v330
        %v332 = vadd.f32 %v314, %v315
        %v333 = vrot.slane %v332, 4
        %v334 = vadd.f32 %v332, %v333
        %v335 = vrot.slane %v334, 2
        %v336 = vadd.f32 %v334, %v335
        %v337 = vrot.slane %v336, 1
        %v338 = vadd.f32 %v336, %v337
        %v339 = vadd.f32 %v316, %v317
        %v340 = vrot.slane %v339, 4
        %v341 = vadd.f32 %v339, %v340
        %v342 = vrot.slane %v341, 2
        %v343 = vadd.f32 %v341, %v342
        %v344 = vrot.slane %v343, 1
        %v345 = vadd.f32 %v343, %v344
        %v346 = vrcp.pop 16.0
        %v347 = vmul.f32 16.0, %v346
        %v348 = vsub.f32 1.0, %v347
        %v349 = vmul.f32 %v346, %v348
        %v350 = vadd.f32 %v346, %v349
        %vm351 = vweird.f32 %v346
        %v352 = vsel %vm351, %v346, %v350
        %v353 = vmul.f32 %v324, %v352
        %v354 = vmul.f32 %v331, %v352
        %v355 = vmul.f32 %v338, %v352
        %v356 = vmul.f32 %v345, %v352
        %v357 = vsub.f32 %v310, %v353
        %v358 = vsub.f32 %v311, %v353
        %v359 = vsub.f32 %v312, %v354
        %v360 = vsub.f32 %v313, %v354
        %v361 = vsub.f32 %v314, %v355
        %v362 = vsub.f32 %v315, %v355
        %v363 = vsub.f32 %v316, %v356
        %v364 = vsub.f32 %v317, %v356
        %v365 = vmul.f32 %v357, %v357
        %v366 = vmul.f32 %v358, %v358
        %v367 = vmul.f32 %v359, %v359
        %v368 = vmul.f32 %v360, %v360
        %v369 = vmul.f32 %v361, %v361
        %v370 = vmul.f32 %v362, %v362
        %v371 = vmul.f32 %v363, %v363
        %v372 = vmul.f32 %v364, %v364
        %v373 = vadd.f32 %v365, %v366
        %v374 = vrot.slane %v373, 4
        %v375 = vadd.f32 %v373, %v374
        %v376 = vrot.slane %v375, 2
        %v377 = vadd.f32 %v375, %v376
        %v378 = vrot.slane %v377, 1
        %v379 = vadd.f32 %v377, %v378
        %v380 = vadd.f32 %v367, %v368
        %v381 = vrot.slane %v380, 4
        %v382 = vadd.f32 %v380, %v381
        %v383 = vrot.slane %v382, 2
        %v384 = vadd.f32 %v382, %v383
        %v385 = vrot.slane %v384, 1
        %v386 = vadd.f32 %v384, %v385
        %v387 = vadd.f32 %v369, %v370
        %v388 = vrot.slane %v387, 4
        %v389 = vadd.f32 %v387, %v388
        %v390 = vrot.slane %v389, 2
        %v391 = vadd.f32 %v389, %v390
        %v392 = vrot.slane %v391, 1
        %v393 = vadd.f32 %v391, %v392
        %v394 = vadd.f32 %v371, %v372
        %v395 = vrot.slane %v394, 4
        %v396 = vadd.f32 %v394, %v395
        %v397 = vrot.slane %v396, 2
        %v398 = vadd.f32 %v396, %v397
        %v399 = vrot.slane %v398, 1
        %v400 = vadd.f32 %v398, %v399
        %v401 = vmul.f32 %v379, %v352
        %v402 = vmul.f32 %v386, %v352
        %v403 = vmul.f32 %v393, %v352
        %v404 = vmul.f32 %v400, %v352
        %v405 = vadd.f32 %v401, 1e-05
        %v406 = vadd.f32 %v402, 1e-05
        %v407 = vadd.f32 %v403, 1e-05
        %v408 = vadd.f32 %v404, 1e-05
        %v409 = vrsqrt.pop %v405
        %v410 = vmul.f32 %v409, %v405
        %v411 = vmul.f32 %v410, %v409
        %v412 = vmul.f32 0.5, %v411
        %v413 = vsub.f32 1.5, %v412
        %v414 = vmul.f32 %v409, %v413
        %vm415 = vweird.f32 %v405
        %vm416 = vweird.f32 %v409
        %vm417 = vmor %vm415, %vm416
        %v418 = vsel %vm417, %v409, %v414
        %v419 = vrsqrt.pop %v406
        %v420 = vmul.f32 %v419, %v406
        %v421 = vmul.f32 %v420, %v419
        %v422 = vmul.f32 0.5, %v421
        %v423 = vsub.f32 1.5, %v422
        %v424 = vmul.f32 %v419, %v423
        %vm425 = vweird.f32 %v406
        %vm426 = vweird.f32 %v419
        %vm427 = vmor %vm425, %vm426
        %v428 = vsel %vm427, %v419, %v424
        %v429 = vrsqrt.pop %v407
        %v430 = vmul.f32 %v429, %v407
        %v431 = vmul.f32 %v430, %v429
        %v432 = vmul.f32 0.5, %v431
        %v433 = vsub.f32 1.5, %v432
        %v434 = vmul.f32 %v429, %v433
        %vm435 = vweird.f32 %v407
        %vm436 = vweird.f32 %v429
        %vm437 = vmor %vm435, %vm436
        %v438 = vsel %vm437, %v429, %v434
        %v439 = vrsqrt.pop %v408
        %v440 = vmul.f32 %v439, %v408
        %v441 = vmul.f32 %v440, %v439
        %v442 = vmul.f32 0.5, %v441
        %v443 = vsub.f32 1.5, %v442
        %v444 = vmul.f32 %v439, %v443
        %vm445 = vweird.f32 %v408
        %vm446 = vweird.f32 %v439
        %vm447 = vmor %vm445, %vm446
        %v448 = vsel %vm447, %v439, %v444
        %v449 = vld [vmem:[%s246] sm:$0x1]
        %v450 = vld [vmem:[%s246 + $0x1] sm:$0x1]
        %v451 = vld [vmem:[%s246 + $0x2] sm:$0x1]
        %v452 = vld [vmem:[%s246 + $0x3] sm:$0x1]
        %v453 = vmul.f32 %v449, %v418
        %v454 = vmul.f32 %v450, %v428
        %v455 = vmul.f32 %v451, %v438
        %v456 = vmul.f32 %v452, %v448
        %v457 = vld [vmem:[%s256] sm:$0x1]
        %v458 = vld [vmem:[%s256 + $0x1] sm:$0x1]
        %v459 = vld [vmem:[%s256 + $0x2] sm:$0x1]
        %v460 = vld [vmem:[%s256 + $0x3] sm:$0x1]
        %v461 = vmul.f32 %v353, %v453
        %v462 = vmul.f32 %v354, %v454
        %v463 = vmul.f32 %v355, %v455
        %v464 = vmul.f32 %v356, %v456
        %v465 = vsub.f32 %v457, %v461
        %v466 = vsub.f32 %v458, %v462
        %v467 = vsub.f32 %v459, %v463
        %v468 = vsub.f32 %v460, %v464
        %v473 = vperm.slane %v453, 0
        %v474 = vperm.slane %v454, 0
        %v475 = vperm.slane %v455, 0
        %v476 = vperm.slane %v456, 0
        %v481 = vmul.f32 %v310, %v473
        %v482 = vmul.f32 %v311, %v473
        %v483 = vmul.f32 %v312, %v474
        %v484 = vmul.f32 %v313, %v474
        %v485 = vmul.f32 %v314, %v475
        %v486 = vmul.f32 %v315, %v475
        %v487 = vmul.f32 %v316, %v476
        %v488 = vmul.f32 %v317, %v476
        %v493 = vperm.slane %v465, 0
        %v494 = vperm.slane %v466, 0
        %v495 = vperm.slane %v467, 0
        %v496 = vperm.slane %v468, 0
        %v501 = vadd.f32 %v481, %v493
        %v502 = vadd.f32 %v482, %v493
        %v503 = vadd.f32 %v483, %v494
        %v504 = vadd.f32 %v484, %v494
        %v505 = vadd.f32 %v485, %v495
        %v506 = vadd.f32 %v486, %v495
        %v507 = vadd.f32 %v487, %v496
        %v508 = vadd.f32 %v488, %v496
        %509 = vst [vmem:[%s289] sm:$0xff] %v501
        %510 = vst [vmem:[%s289 + $0x8] sm:$0xff] %v502
        %511 = vst [vmem:[%s289 + $0x10] sm:$0xff] %v503
        %512 = vst [vmem:[%s289 + $0x18] sm:$0xff] %v504
        %513 = vst [vmem:[%s289 + $0x20] sm:$0xff] %v505
        %514 = vst [vmem:[%s289 + $0x28] sm:$0xff] %v506
        %515 = vst [vmem:[%s289 + $0x30] sm:$0xff] %v507
        %516 = vst [vmem:[%s289 + $0x38] sm:$0xff] %v508
        %s517 = sand.u32 %s109, 1
        %s518 = scalar_lea.sflag [#allocation4], %s517
        %s519 = sand.u32 %s109, 1
        %s520 = smul.addr %s519, 64
        %s521 = scalar_lea.vmem [#allocation8], %s520
        // Predicated region
        $region45: #{tpu_custom_call.1} parent=31 // pred_check
          %p522 = pneg %p119
        $region46: #{tpu_custom_call.1} parent=31 // pred_check_branch
          %524 = sbr.rel (%p522) target = $region48
        $region47: #{tpu_custom_call.1} parent=31 // pred_region
          %s525 = smul.u32 4, %s23
          %s526 = ssub.s32 7, %s525
          %p527 = scmp.lt.s32.totalorder %s526, 4
          %s528 = scalar_select %p527, %s526, 4
          %s529 = smul.u32 8, %s528
          %s530 = smul.u32 %s529, 2
          %s531 = ssub.s32 64, %s530
          %s532 = sshll.u32 %s531, 4
          %533 = vsyncadd %s518, %s532
          %p534 = scmp.ne.s32.totalorder 0, %s530
          %s535 = smul.addr %s525, 2
          %s536 = smul.addr %s535, 8
          %s537 = scalar_lea.hbm %s3, %s536
          %s538 = smul.u32 %s528, 2
          %s539 = smul.u32 8, %s538
          %s540 = sshll.u32 %s521, 4
          %s541 = int_to_ptr.vmem [resolvable:$true] %s540
          %s542 = sshll.u32 %s537, 4
          %s543 = int_to_ptr.hbm [resolvable:$true] %s542
          %s544 = sshll.u32 %s539, 4
          %548 = dma.vmem_to_hbm [thread:$0]  (%p534), %s541, %s544, %s543, %s518, 128, 128, 8
        $region48: #{tpu_custom_call.1} parent=31 // pred_fallthru
          _
      $region32: #{tpu_custom_call.1} parent=5 // pred_fallthru
        _
      %p549 = scmp.le.s32.totalorder 2, %s18
      // Predicated region
      $region49: #{tpu_custom_call.1} parent=5 // pred_check
        %p550 = pneg %p549
      $region50: #{tpu_custom_call.1} parent=5 // pred_check_branch
        %552 = sbr.rel (%p550) target = $region52
      $region51: #{tpu_custom_call.1} parent=5 // pred_region
        %s553 = ssub.s32 %s18, 2
        // Predicated region
        $region53: #{tpu_custom_call.1} parent=51 // pred_check
          %p554 = pneg %p125
        $region54: #{tpu_custom_call.1} parent=51 // pred_check_branch
          %556 = sbr.rel (%p554) target = $region56
        $region55: #{tpu_custom_call.1} parent=51 // pred_region
          %s557 = sand.u32 %s110, 1
          %s558 = scalar_lea.sflag [#allocation4], %s557
          %s559 = sand.u32 %s110, 1
          %s560 = smul.addr %s559, 64
          %s561 = scalar_lea.vmem [#allocation8], %s560
          %563 = dma.done %s558, 1024
        $region56: #{tpu_custom_call.1} parent=51 // pred_fallthru
          _
      $region52: #{tpu_custom_call.1} parent=5 // pred_fallthru
        _
    $region6: #{tpu_custom_call.1} parent=1 // loop_footer
      %s22 = sadd.s32 1, %s18
    $region7: #{tpu_custom_call.1} parent=1 // loop_footer_branch
      %17 = sbr.rel target = $region3
    $region8: #{tpu_custom_call.1} parent=1 // loop_exit
      _
    %564 = vsyncpa [#allocation3], 1
    %s565 = scalar_lea.sflag [#allocation3], 1
    %566 = vsyncpa %s565, 1
    %567 = vsyncpa [#allocation6], 1
    %s568 = scalar_lea.sflag [#allocation6], 1
    %569 = vsyncpa %s568, 1
    %570 = vsyncpa [#allocation4], 1
    %s571 = scalar_lea.sflag [#allocation4], 1
    %572 = vsyncpa %s571, 1

</llo_original>
